<compile_context>
chip_gen: v7x
topology: tpu7x:2x2x1
jax: 0.10.0
libtpu: 0.0.40
codegen_flags: <defaults>
</compile_context>

<pallas_src>
import jax
import jax.numpy as jnp
from jax.experimental import pallas as pl
from jax.experimental.pallas import tpu as pltpu


def _mlp_kernel(x_ref, w1_ref, b1_ref, w2_ref, b2_ref, w3_ref, b3_ref,
                w4_ref, b4_ref, o_ref):
    # Feature-major fused MLP: x_ref is [12, Bt]  (features on sublanes, batch on lanes).
    x = x_ref[...]
    h1 = jnp.maximum(
        jnp.dot(w1_ref[...], x, preferred_element_type=jnp.float32) + b1_ref[...], 0.0)   # [32, Bt]
    h2 = jnp.maximum(
        jnp.dot(w2_ref[...], h1, preferred_element_type=jnp.float32) + b2_ref[...], 0.0)  # [64, Bt]
    h3 = jnp.maximum(
        jnp.dot(w3_ref[...], h2, preferred_element_type=jnp.float32) + b3_ref[...], 0.0)  # [16, Bt]
    # Final 16->1 layer: [1,16] @ [16,Bt] -> [1,Bt]; result is lane-dense in the batch dim.
    out = jnp.dot(w4_ref[...], h3, preferred_element_type=jnp.float32) + b4_ref[...]
    o_ref[...] = out.astype(o_ref.dtype)


def _default_batch_tile(B, cap=16384):
    """Largest tile <= cap that divides B.  If B is small, use the whole batch."""
    if B <= cap:
        return B
    t = cap - (cap % 128)
    while t >= 128:
        if B % t == 0:
            return t
        t -= 128
    return B  # fallback: single tile (may stress VMEM for huge odd-sized B)


def housing_model2_forward(x, params, *, batch_tile=None):
    """x: [B, 12] float32.  Returns [B] float32 (same as the PyTorch forward)."""
    B, D_in = x.shape
    assert D_in == 12
    (w1, b1), (w2, b2), (w3, b3), (w4, b4) = params

    if batch_tile is None:
        batch_tile = _default_batch_tile(B)
    assert B % batch_tile == 0, "batch_tile must divide B"
    if batch_tile != B:
        # Batch maps to the lane axis: tiles must be lane-aligned.
        assert batch_tile % 128 == 0, "batch_tile must be a multiple of 128 when tiling"

    # One transpose in the wrapper: feature-major activations ([12, B]) for the kernel.
    x_fm = x.T

    grid = (B // batch_tile,)

    def batch_map(i):
        return (0, i)

    def replicated_map(i):
        return (0, 0)

    out = pl.pallas_call(
        _mlp_kernel,
        out_shape=jax.ShapeDtypeStruct((1, B), jnp.float32),
        grid_spec=pltpu.PrefetchScalarGridSpec(
            num_scalar_prefetch=0,
            grid=grid,
            in_specs=[
                pl.BlockSpec((12, batch_tile), batch_map),   # x^T tile  [12, Bt]
                pl.BlockSpec((32, 12), replicated_map),      # w1 [out, in]
                pl.BlockSpec((32, 1), replicated_map),       # b1 [out, 1]
                pl.BlockSpec((64, 32), replicated_map),      # w2
                pl.BlockSpec((64, 1), replicated_map),       # b2
                pl.BlockSpec((16, 64), replicated_map),      # w3
                pl.BlockSpec((16, 1), replicated_map),       # b3
                pl.BlockSpec((1, 16), replicated_map),       # w4
                pl.BlockSpec((1, 1), replicated_map),        # b4
            ],
            out_specs=pl.BlockSpec((1, batch_tile), batch_map),  # lane-dense output
        ),
        compiler_params=pltpu.CompilerParams(
            dimension_semantics=("parallel",)),
    )(x_fm, w1, b1, w2, b2, w3, b3, w4, b4)

    return out[0]  # [B]  (== squeeze(-1))


def init_params(key):
    """Deterministic init mimicking nn.Linear's U(-1/sqrt(fan_in), 1/sqrt(fan_in)).

    Weights are stored in PyTorch's [out_features, in_features] layout; biases as
    [out_features, 1] (column vector, broadcasts over the batch lanes in-kernel).
    """
    dims = [(12, 32), (32, 64), (64, 16), (16, 1)]
    params = []
    for (fan_in, fan_out) in dims:
        key, kw, kb = jax.random.split(key, 3)
        bound = 1.0 / jnp.sqrt(fan_in)
        w = jax.random.uniform(kw, (fan_out, fan_in), jnp.float32, -bound, bound)
        b = jax.random.uniform(kb, (fan_out, 1), jnp.float32, -bound, bound)
        params.append((w, b))
    return params


def reference_forward(x, params):
    (w1, b1), (w2, b2), (w3, b3), (w4, b4) = params
    h = jnp.maximum(x @ w1.T + b1[:, 0], 0.0)
    h = jnp.maximum(h @ w2.T + b2[:, 0], 0.0)
    h = jnp.maximum(h @ w3.T + b3[:, 0], 0.0)
    o = h @ w4.T + b4[:, 0]
    return o[:, 0]


if __name__ == "__main__":
    key = jax.random.PRNGKey(0)
    key, kx, kx2 = jax.random.split(key, 3)
    params = init_params(key)

    # Small single-tile case (matches the module spec shapes).
    B = 8
    x = jax.random.normal(kx, (B, 12), jnp.float32)
    y = jax.block_until_ready(housing_model2_forward(x, params))
    y_ref = reference_forward(x, params)
    assert y.shape == (B,)
    assert jnp.allclose(y, y_ref, atol=1e-4, rtol=1e-4)

    # Multi-step grid case: exercises the tiled / pipelined path (batch on lanes).
    B2 = 256
    x2 = jax.random.normal(kx2, (B2, 12), jnp.float32)
    y2 = jax.block_until_ready(housing_model2_forward(x2, params, batch_tile=128))
    y2_ref = reference_forward(x2, params)
    assert y2.shape == (B2,)
    assert jnp.allclose(y2, y2_ref, atol=1e-4, rtol=1e-4)

    print("KERNEL_OK")
</pallas_src>

<mosaic_0001>
module attributes {stable_mosaic.version = 11 : i64} {
  func.func @_mlp_kernel(%arg0: i32, %arg1: memref<12x8xf32, #tpu.memory_space<vmem>>, %arg2: memref<32x12xf32, #tpu.memory_space<vmem>>, %arg3: memref<32x1xf32, #tpu.memory_space<vmem>>, %arg4: memref<64x32xf32, #tpu.memory_space<vmem>>, %arg5: memref<64x1xf32, #tpu.memory_space<vmem>>, %arg6: memref<16x64xf32, #tpu.memory_space<vmem>>, %arg7: memref<16x1xf32, #tpu.memory_space<vmem>>, %arg8: memref<1x16xf32, #tpu.memory_space<vmem>>, %arg9: memref<1x1xf32, #tpu.memory_space<vmem>>, %arg10: memref<1x8xf32, #tpu.memory_space<vmem>>) attributes {dimension_semantics = [#tpu.dimension_semantics<parallel>], iteration_bounds = array<i64: 1>, scalar_prefetch = 0 : i64, scratch_operands = 0 : i64, tpu.core_type = #tpu.core_type<tc>, window_params = [{transform_indices = @transform_0, window_bounds = array<i64: 12, 8>}, {pipeline_mode = #tpu.pipeline_mode<synchronous>, transform_indices = @transform_1, window_bounds = array<i64: 32, 12>}, {pipeline_mode = #tpu.pipeline_mode<synchronous>, transform_indices = @transform_2, window_bounds = array<i64: 32, 1>}, {pipeline_mode = #tpu.pipeline_mode<synchronous>, transform_indices = @transform_3, window_bounds = array<i64: 64, 32>}, {pipeline_mode = #tpu.pipeline_mode<synchronous>, transform_indices = @transform_4, window_bounds = array<i64: 64, 1>}, {pipeline_mode = #tpu.pipeline_mode<synchronous>, transform_indices = @transform_5, window_bounds = array<i64: 16, 64>}, {pipeline_mode = #tpu.pipeline_mode<synchronous>, transform_indices = @transform_6, window_bounds = array<i64: 16, 1>}, {pipeline_mode = #tpu.pipeline_mode<synchronous>, transform_indices = @transform_7, window_bounds = array<i64: 1, 16>}, {pipeline_mode = #tpu.pipeline_mode<synchronous>, transform_indices = @transform_8, window_bounds = array<i64: 1, 1>}, {transform_indices = @transform_9, window_bounds = array<i64: 1, 8>}]} {
    %c0 = arith.constant 0 : index
    %c0_0 = arith.constant 0 : index
    %0 = vector.load %arg1[%c0, %c0_0] : memref<12x8xf32, #tpu.memory_space<vmem>>, vector<12x8xf32>
    %c0_1 = arith.constant 0 : index
    %c0_2 = arith.constant 0 : index
    %1 = vector.load %arg2[%c0_1, %c0_2] : memref<32x12xf32, #tpu.memory_space<vmem>>, vector<32x12xf32>
    %cst = arith.constant dense<0.000000e+00> : vector<32x8xf32>
    %2 = tpu.matmul %1, %0, %cst {dimension_numbers = #tpu.dot_dimension_numbers<[1], [0], [0], [1], [0, 0, 1, 1], [], []>} : vector<32x12xf32>, vector<12x8xf32>, vector<32x8xf32> -> vector<32x8xf32>
    %c0_3 = arith.constant 0 : index
    %c0_4 = arith.constant 0 : index
    %3 = vector.load %arg3[%c0_3, %c0_4] : memref<32x1xf32, #tpu.memory_space<vmem>>, vector<32x1xf32>
    %4 = vector.broadcast %3 : vector<32x1xf32> to vector<32x8xf32>
    %5 = arith.addf %2, %4 : vector<32x8xf32>
    %cst_5 = arith.constant 0.000000e+00 : f32
    %6 = vector.broadcast %cst_5 : f32 to vector<32x8xf32>
    %7 = arith.maximumf %5, %6 : vector<32x8xf32>
    %c0_6 = arith.constant 0 : index
    %c0_7 = arith.constant 0 : index
    %8 = vector.load %arg4[%c0_6, %c0_7] : memref<64x32xf32, #tpu.memory_space<vmem>>, vector<64x32xf32>
    %cst_8 = arith.constant dense<0.000000e+00> : vector<64x8xf32>
    %9 = tpu.matmul %8, %7, %cst_8 {dimension_numbers = #tpu.dot_dimension_numbers<[1], [0], [0], [1], [0, 0, 1, 1], [], []>} : vector<64x32xf32>, vector<32x8xf32>, vector<64x8xf32> -> vector<64x8xf32>
    %c0_9 = arith.constant 0 : index
    %c0_10 = arith.constant 0 : index
    %10 = vector.load %arg5[%c0_9, %c0_10] : memref<64x1xf32, #tpu.memory_space<vmem>>, vector<64x1xf32>
    %11 = vector.broadcast %10 : vector<64x1xf32> to vector<64x8xf32>
    %12 = arith.addf %9, %11 : vector<64x8xf32>
    %cst_11 = arith.constant 0.000000e+00 : f32
    %13 = vector.broadcast %cst_11 : f32 to vector<64x8xf32>
    %14 = arith.maximumf %12, %13 : vector<64x8xf32>
    %c0_12 = arith.constant 0 : index
    %c0_13 = arith.constant 0 : index
    %15 = vector.load %arg6[%c0_12, %c0_13] : memref<16x64xf32, #tpu.memory_space<vmem>>, vector<16x64xf32>
    %cst_14 = arith.constant dense<0.000000e+00> : vector<16x8xf32>
    %16 = tpu.matmul %15, %14, %cst_14 {dimension_numbers = #tpu.dot_dimension_numbers<[1], [0], [0], [1], [0, 0, 1, 1], [], []>} : vector<16x64xf32>, vector<64x8xf32>, vector<16x8xf32> -> vector<16x8xf32>
    %c0_15 = arith.constant 0 : index
    %c0_16 = arith.constant 0 : index
    %17 = vector.load %arg7[%c0_15, %c0_16] : memref<16x1xf32, #tpu.memory_space<vmem>>, vector<16x1xf32>
    %18 = vector.broadcast %17 : vector<16x1xf32> to vector<16x8xf32>
    %19 = arith.addf %16, %18 : vector<16x8xf32>
    %cst_17 = arith.constant 0.000000e+00 : f32
    %20 = vector.broadcast %cst_17 : f32 to vector<16x8xf32>
    %21 = arith.maximumf %19, %20 : vector<16x8xf32>
    %c0_18 = arith.constant 0 : index
    %c0_19 = arith.constant 0 : index
    %22 = vector.load %arg8[%c0_18, %c0_19] : memref<1x16xf32, #tpu.memory_space<vmem>>, vector<1x16xf32>
    %cst_20 = arith.constant dense<0.000000e+00> : vector<1x8xf32>
    %23 = tpu.matmul %22, %21, %cst_20 {dimension_numbers = #tpu.dot_dimension_numbers<[1], [0], [0], [1], [0, 0, 1, 1], [], []>} : vector<1x16xf32>, vector<16x8xf32>, vector<1x8xf32> -> vector<1x8xf32>
    %c0_21 = arith.constant 0 : index
    %c0_22 = arith.constant 0 : index
    %24 = vector.load %arg9[%c0_21, %c0_22] : memref<1x1xf32, #tpu.memory_space<vmem>>, vector<1x1xf32>
    %25 = vector.broadcast %24 : vector<1x1xf32> to vector<1x8xf32>
    %26 = arith.addf %23, %25 : vector<1x8xf32>
    %c0_23 = arith.constant 0 : index
    %c0_24 = arith.constant 0 : index
    %27 = vector.load %arg10[%c0_23, %c0_24] : memref<1x8xf32, #tpu.memory_space<vmem>>, vector<1x8xf32>
    tpu.vector_store %arg10[%c0_23, %c0_24], %26 {strides = array<i32>} : memref<1x8xf32, #tpu.memory_space<vmem>>, vector<1x8xf32>,
    return
  }
  func.func @transform_0(%arg0: i32) -> (i32, i32) {
    %c0_i32 = arith.constant 0 : i32
    %c0_i32_0 = arith.constant 0 : i32
    return %c0_i32, %arg0 : i32, i32
  }
  func.func @transform_1(%arg0: i32) -> (i32, i32) {
    %c0_i32 = arith.constant 0 : i32
    %c0_i32_0 = arith.constant 0 : i32
    %c0_i32_1 = arith.constant 0 : i32
    return %c0_i32, %c0_i32_0 : i32, i32
  }
  func.func @transform_2(%arg0: i32) -> (i32, i32) {
    %c0_i32 = arith.constant 0 : i32
    %c0_i32_0 = arith.constant 0 : i32
    %c0_i32_1 = arith.constant 0 : i32
    return %c0_i32, %c0_i32_0 : i32, i32
  }
  func.func @transform_3(%arg0: i32) -> (i32, i32) {
    %c0_i32 = arith.constant 0 : i32
    %c0_i32_0 = arith.constant 0 : i32
    %c0_i32_1 = arith.constant 0 : i32
    return %c0_i32, %c0_i32_0 : i32, i32
  }
  func.func @transform_4(%arg0: i32) -> (i32, i32) {
    %c0_i32 = arith.constant 0 : i32
    %c0_i32_0 = arith.constant 0 : i32
    %c0_i32_1 = arith.constant 0 : i32
    return %c0_i32, %c0_i32_0 : i32, i32
  }
  func.func @transform_5(%arg0: i32) -> (i32, i32) {
    %c0_i32 = arith.constant 0 : i32
    %c0_i32_0 = arith.constant 0 : i32
    %c0_i32_1 = arith.constant 0 : i32
    return %c0_i32, %c0_i32_0 : i32, i32
  }
  func.func @transform_6(%arg0: i32) -> (i32, i32) {
    %c0_i32 = arith.constant 0 : i32
    %c0_i32_0 = arith.constant 0 : i32
    %c0_i32_1 = arith.constant 0 : i32
    return %c0_i32, %c0_i32_0 : i32, i32
  }
  func.func @transform_7(%arg0: i32) -> (i32, i32) {
    %c0_i32 = arith.constant 0 : i32
    %c0_i32_0 = arith.constant 0 : i32
    %c0_i32_1 = arith.constant 0 : i32
    return %c0_i32, %c0_i32_0 : i32, i32
  }
  func.func @transform_8(%arg0: i32) -> (i32, i32) {
    %c0_i32 = arith.constant 0 : i32
    %c0_i32_0 = arith.constant 0 : i32
    %c0_i32_1 = arith.constant 0 : i32
    return %c0_i32, %c0_i32_0 : i32, i32
  }
  func.func @transform_9(%arg0: i32) -> (i32, i32) {
    %c0_i32 = arith.constant 0 : i32
    %c0_i32_0 = arith.constant 0 : i32
    return %c0_i32, %arg0 : i32, i32
  }
}

</mosaic_0001>

<llo_original>
// kernel: tpu_custom_call.1
$region0: #{tpu_custom_call.1}
  #allocation0 [shape = 'u32[]', space=smem, size = 0x4, offset = 0x4, fixed_abs, tag = 'smem constant byte address 0x4 - core index']
  #allocation1 [shape = 'u32[144,128]{1,0:T(1,128)}', space=vmem, size = 0x12000, scoped, tag = 'internal scratch']
  #allocation2 [shape = 'f32[1,1]{1,0:T(1,128)S(1)}', space=vmem, size = 0x200, scoped, tag = 'scoped memory for tpu_custom_call.1']
  %s0 = inlined_call_operand.vmem [shape: f32[12,8], index: 0, kind: input, shape index: {}]
  %s1 = inlined_call_operand.vmem [shape: f32[32,12], index: 1, kind: input, shape index: {}]
  %s2 = inlined_call_operand.vmem [shape: f32[32,1], index: 2, kind: input, shape index: {}]
  %s3 = inlined_call_operand.vmem [shape: f32[64,32], index: 3, kind: input, shape index: {}]
  %s4 = inlined_call_operand.vmem [shape: f32[64,1], index: 4, kind: input, shape index: {}]
  %s5 = inlined_call_operand.vmem [shape: f32[16,64], index: 5, kind: input, shape index: {}]
  %s6 = inlined_call_operand.vmem [shape: f32[16,1], index: 6, kind: input, shape index: {}]
  %s7 = inlined_call_operand.vmem [shape: f32[1,16], index: 7, kind: input, shape index: {}]
  %s8 = inlined_call_operand.<no memory space> [shape: f32[1,1], index: 8, kind: input, shape index: {}]
  %s9 = inlined_call_operand.hbm [shape: f32[1,8], index: 9, kind: output, shape index: {}]
  %s10 = sld [smem:[#allocation0]]
  $region46: #{tpu_custom_call.1} parent=0
    _
  %s12 = ssub.s32 1, %s10
  %s13 = scalar_select 0, %s12, %s10
  %v14 = vstv %s8
  %15 = vst [vmem:[#allocation2] sm:$0x1] %v14
  $region1: #{tpu_custom_call.1} parent=0
    #allocation3 [shape = 'u8[512]{0}', space=vmem, size = 0x400, scoped, tag = 'output window, operand 0, single buffered']
    #allocation4 [shape = 's32[1]{0}', space=sflag, size = 0x4, scoped, tag = 'scoped memory for tpu_custom_call.1']
    %16 = vsyncpa [#allocation4], 0
    // Predicated region
    $region2: #{tpu_custom_call.1} parent=1 // pred_check
      _
    $region3: #{tpu_custom_call.1} parent=1 // pred_check_branch
      %18 = sbr.rel (0) target = $region5
    $region4: #{tpu_custom_call.1} parent=1 // pred_region
      _
    $region5: #{tpu_custom_call.1} parent=1 // pred_fallthru
      _
    // Predicated region
    $region6: #{tpu_custom_call.1} parent=1 // pred_check
      _
    $region7: #{tpu_custom_call.1} parent=1 // pred_check_branch
      %20 = sbr.rel (0) target = $region9
    $region8: #{tpu_custom_call.1} parent=1 // pred_region
      _
    $region9: #{tpu_custom_call.1} parent=1 // pred_fallthru
      _
    // Predicated region
    $region10: #{tpu_custom_call.1} parent=1 // pred_check
      _
    $region11: #{tpu_custom_call.1} parent=1 // pred_check_branch
      %22 = sbr.rel (0) target = $region13
    $region12: #{tpu_custom_call.1} parent=1 // pred_region
      _
    $region13: #{tpu_custom_call.1} parent=1 // pred_fallthru
      _
    // Predicated region
    $region14: #{tpu_custom_call.1} parent=1 // pred_check
      _
    $region15: #{tpu_custom_call.1} parent=1 // pred_check_branch
      %24 = sbr.rel (0) target = $region17
    $region16: #{tpu_custom_call.1} parent=1 // pred_region
      _
    $region17: #{tpu_custom_call.1} parent=1 // pred_fallthru
      _
    // Predicated region
    $region18: #{tpu_custom_call.1} parent=1 // pred_check
      _
    $region19: #{tpu_custom_call.1} parent=1 // pred_check_branch
      %26 = sbr.rel (0) target = $region21
    $region20: #{tpu_custom_call.1} parent=1 // pred_region
      _
    $region21: #{tpu_custom_call.1} parent=1 // pred_fallthru
      _
    // Predicated region
    $region22: #{tpu_custom_call.1} parent=1 // pred_check
      _
    $region23: #{tpu_custom_call.1} parent=1 // pred_check_branch
      %28 = sbr.rel (0) target = $region25
    $region24: #{tpu_custom_call.1} parent=1 // pred_region
      _
    $region25: #{tpu_custom_call.1} parent=1 // pred_fallthru
      _
    // Predicated region
    $region26: #{tpu_custom_call.1} parent=1 // pred_check
      _
    $region27: #{tpu_custom_call.1} parent=1 // pred_check_branch
      %30 = sbr.rel (0) target = $region29
    $region28: #{tpu_custom_call.1} parent=1 // pred_region
      _
    $region29: #{tpu_custom_call.1} parent=1 // pred_fallthru
      _
    // Predicated region
    $region30: #{tpu_custom_call.1} parent=1 // pred_check
      _
    $region31: #{tpu_custom_call.1} parent=1 // pred_check_branch
      %32 = sbr.rel (0) target = $region33
    $region32: #{tpu_custom_call.1} parent=1 // pred_region
      _
    $region33: #{tpu_custom_call.1} parent=1 // pred_fallthru
      _
    // Predicated region
    $region34: #{tpu_custom_call.1} parent=1 // pred_check
      _
    $region35: #{tpu_custom_call.1} parent=1 // pred_check_branch
      %34 = sbr.rel (0) target = $region37
    $region36: #{tpu_custom_call.1} parent=1 // pred_region
      _
    $region37: #{tpu_custom_call.1} parent=1 // pred_fallthru
      _
    %v35 = vld [vmem:[%s0] sm:$0xff]
    %v36 = vld [vmem:[%s0 + $0x8] sm:$0xf]
    %v37 = vld [vmem:[%s1] sm:$0xff]
    %v38 = vld [vmem:[%s1 + $0x8] sm:$0xff]
    %v39 = vld [vmem:[%s1 + $0x10] sm:$0xff]
    %v40 = vld [vmem:[%s1 + $0x18] sm:$0xff]
    %v41 = vld [vmem:[%s2] sm:$0xff]
    %v42 = vld [vmem:[%s2 + $0x8] sm:$0xff]
    %v43 = vld [vmem:[%s2 + $0x10] sm:$0xff]
    %v44 = vld [vmem:[%s2 + $0x18] sm:$0xff]
    %46 = vset.pattern.permute.xlu0 0
    %47 = vperm.xlu0 %46, %v41
    %v48 = vpop.permute.xlu0 %47
    %51 = vset.pattern.permute.xlu0 0
    %52 = vperm.xlu0 %51, %v42
    %v53 = vpop.permute.xlu0 %52
    %56 = vset.pattern.permute.xlu0 0
    %57 = vperm.xlu0 %56, %v43
    %v58 = vpop.permute.xlu0 %57
    %61 = vset.pattern.permute.xlu0 0
    %62 = vperm.xlu0 %61, %v44
    %v63 = vpop.permute.xlu0 %62
    %vm65 = vcmask 97280
    %v67 = vsel %vm65, %v37, 0
    %v70 = vsel %vm65, %v38, 0
    %v73 = vsel %vm65, %v39, 0
    %v76 = vsel %vm65, %v40, 0
    %vm78 = vcmask 1043456
    %v80 = vsel %vm78, %v36, 0
    %82 = vmatprep.subr.mxu0 0.0
    %83 = vmatpush1.msra.mxu0 %v35
    %84 = vmatprep.subr.mxu0 0.0
    %85 = vmatpush1.msra.mxu0 %v80
    %86 = vmatprep.subr.mxu0 0.0
    %87 = vmatpush1.msra.mxu0 0.0
    %88 = vmatprep.subr.mxu0 0.0
    %89 = vmatpush1.msra.mxu0 0.0
    %90 = vmatprep.subr.mxu0 0.0
    %91 = vmatpush1.msra.mxu0 0.0
    %92 = vmatprep.subr.mxu0 0.0
    %93 = vmatpush1.msra.mxu0 0.0
    %94 = vmatprep.subr.mxu0 0.0
    %95 = vmatpush1.msra.mxu0 0.0
    %96 = vmatprep.subr.mxu0 0.0
    %97 = vmatpush1.msra.mxu0 0.0
    %98 = vmatprep.subr.mxu0 0.0
    %99 = vmatpush1.msra.mxu0 0.0
    %100 = vmatprep.subr.mxu0 0.0
    %101 = vmatpush1.msra.mxu0 0.0
    %102 = vmatprep.subr.mxu0 0.0
    %103 = vmatpush1.msra.mxu0 0.0
    %104 = vmatprep.subr.mxu0 0.0
    %105 = vmatpush1.msra.mxu0 0.0
    %106 = vmatprep.subr.mxu0 0.0
    %107 = vmatpush1.msra.mxu0 0.0
    %108 = vmatprep.subr.mxu0 0.0
    %109 = vmatpush1.msra.mxu0 0.0
    %110 = vmatprep.subr.mxu0 0.0
    %111 = vmatpush1.msra.mxu0 0.0
    %112 = vmatprep.subr.mxu0 0.0
    %113 = vmatpush1.msra.mxu0 0.0
    %114 = vmatprep.subr.mxu0 0.0
    %115 = vmatpush1.msra.mxu0 0.0
    %116 = vmatprep.subr.mxu0 0.0
    %117 = vmatpush1.msra.mxu0 0.0
    %118 = vmatprep.subr.mxu0 0.0
    %119 = vmatpush1.msra.mxu0 0.0
    %120 = vmatprep.subr.mxu0 0.0
    %121 = vmatpush1.msra.mxu0 0.0
    %122 = vmatprep.subr.mxu0 0.0
    %123 = vmatpush1.msra.mxu0 0.0
    %124 = vmatprep.subr.mxu0 0.0
    %125 = vmatpush1.msra.mxu0 0.0
    %126 = vmatprep.subr.mxu0 0.0
    %127 = vmatpush1.msra.mxu0 0.0
    %128 = vmatprep.subr.mxu0 0.0
    %129 = vmatpush1.msra.mxu0 0.0
    %130 = vmatprep.subr.mxu0 0.0
    %131 = vmatpush1.msra.mxu0 0.0
    %132 = vmatprep.subr.mxu0 0.0
    %133 = vmatpush1.msra.mxu0 0.0
    %134 = vmatprep.subr.mxu0 0.0
    %135 = vmatpush1.msra.mxu0 0.0
    %136 = vmatprep.subr.mxu0 0.0
    %137 = vmatpush1.msra.mxu0 0.0
    %138 = vmatprep.subr.mxu0 0.0
    %139 = vmatpush1.msra.mxu0 0.0
    %140 = vmatprep.subr.mxu0 0.0
    %141 = vmatpush1.msra.mxu0 0.0
    %142 = vmatprep.subr.mxu0 0.0
    %143 = vmatpush1.msra.mxu0 0.0
    %144 = vmatprep.subr.mxu0 0.0
    %145 = vmatpush1.msra.mxu0 0.0
    %146 = vmatprep.mubr.f32.mxu0 0.0
    %147 = vmatmul.mubr.f32.gmra.mrb[0].mxu0 %v67
    %v148 = vpop.f32.mrb[0].mxu0
    %v149 = vadd.f32 %v48, %v148
    %v150 = vpop.f32.mrb[0].mxu0
    %151 = vmatprep.mubr.f32.mxu0 0.0
    %152 = vmatmul.mubr.f32.gmra.mrb[0].mxu0 %v70
    %v153 = vpop.f32.mrb[0].mxu0
    %v154 = vadd.f32 %v53, %v153
    %v155 = vpop.f32.mrb[0].mxu0
    %156 = vmatprep.mubr.f32.mxu0 0.0
    %157 = vmatmul.mubr.f32.gmra.mrb[0].mxu0 %v73
    %v158 = vpop.f32.mrb[0].mxu0
    %v159 = vadd.f32 %v58, %v158
    %v160 = vpop.f32.mrb[0].mxu0
    %161 = vmatprep.mubr.f32.mxu0 0.0
    %162 = vmatmul.mubr.f32.gmra.mrb[0].mxu0 %v76
    %v163 = vpop.f32.mrb[0].mxu0
    %v164 = vadd.f32 %v63, %v163
    %v165 = vpop.f32.mrb[0].mxu0
    %166 = vdwg.mxu0
    %v167 = vmax.f32 %v149, 0.0
    %v168 = vmax.f32 %v154, 0.0
    %v169 = vmax.f32 %v159, 0.0
    %v170 = vmax.f32 %v164, 0.0
    %v171 = vld [vmem:[%s3] sm:$0xff]
    %v172 = vld [vmem:[%s3 + $0x8] sm:$0xff]
    %v173 = vld [vmem:[%s3 + $0x10] sm:$0xff]
    %v174 = vld [vmem:[%s3 + $0x18] sm:$0xff]
    %v175 = vld [vmem:[%s3 + $0x20] sm:$0xff]
    %v176 = vld [vmem:[%s3 + $0x28] sm:$0xff]
    %v177 = vld [vmem:[%s3 + $0x30] sm:$0xff]
    %v178 = vld [vmem:[%s3 + $0x38] sm:$0xff]
    %v179 = vld [vmem:[%s4] sm:$0xff]
    %v180 = vld [vmem:[%s4 + $0x8] sm:$0xff]
    %v181 = vld [vmem:[%s4 + $0x10] sm:$0xff]
    %v182 = vld [vmem:[%s4 + $0x18] sm:$0xff]
    %v183 = vld [vmem:[%s4 + $0x20] sm:$0xff]
    %v184 = vld [vmem:[%s4 + $0x28] sm:$0xff]
    %v185 = vld [vmem:[%s4 + $0x30] sm:$0xff]
    %v186 = vld [vmem:[%s4 + $0x38] sm:$0xff]
    %188 = vset.pattern.permute.xlu0 0
    %189 = vperm.xlu0 %188, %v179
    %v190 = vpop.permute.xlu0 %189
    %193 = vset.pattern.permute.xlu0 0
    %194 = vperm.xlu0 %193, %v180
    %v195 = vpop.permute.xlu0 %194
    %198 = vset.pattern.permute.xlu0 0
    %199 = vperm.xlu0 %198, %v181
    %v200 = vpop.permute.xlu0 %199
    %203 = vset.pattern.permute.xlu0 0
    %204 = vperm.xlu0 %203, %v182
    %v205 = vpop.permute.xlu0 %204
    %208 = vset.pattern.permute.xlu0 0
    %209 = vperm.xlu0 %208, %v183
    %v210 = vpop.permute.xlu0 %209
    %213 = vset.pattern.permute.xlu0 0
    %214 = vperm.xlu0 %213, %v184
    %v215 = vpop.permute.xlu0 %214
    %218 = vset.pattern.permute.xlu0 0
    %219 = vperm.xlu0 %218, %v185
    %v220 = vpop.permute.xlu0 %219
    %223 = vset.pattern.permute.xlu0 0
    %224 = vperm.xlu0 %223, %v186
    %v225 = vpop.permute.xlu0 %224
    %vm227 = vcmask 261120
    %v229 = vsel %vm227, %v171, 0
    %v232 = vsel %vm227, %v172, 0
    %v235 = vsel %vm227, %v173, 0
    %v238 = vsel %vm227, %v174, 0
    %v241 = vsel %vm227, %v175, 0
    %v244 = vsel %vm227, %v176, 0
    %v247 = vsel %vm227, %v177, 0
    %v250 = vsel %vm227, %v178, 0
    %252 = vmatprep.subr.mxu0 0.0
    %253 = vmatpush1.msra.mxu0 %v167
    %254 = vmatprep.subr.mxu0 0.0
    %255 = vmatpush1.msra.mxu0 %v168
    %256 = vmatprep.subr.mxu0 0.0
    %257 = vmatpush1.msra.mxu0 %v169
    %258 = vmatprep.subr.mxu0 0.0
    %259 = vmatpush1.msra.mxu0 %v170
    %260 = vmatprep.subr.mxu0 0.0
    %261 = vmatpush1.msra.mxu0 0.0
    %262 = vmatprep.subr.mxu0 0.0
    %263 = vmatpush1.msra.mxu0 0.0
    %264 = vmatprep.subr.mxu0 0.0
    %265 = vmatpush1.msra.mxu0 0.0
    %266 = vmatprep.subr.mxu0 0.0
    %267 = vmatpush1.msra.mxu0 0.0
    %268 = vmatprep.subr.mxu0 0.0
    %269 = vmatpush1.msra.mxu0 0.0
    %270 = vmatprep.subr.mxu0 0.0
    %271 = vmatpush1.msra.mxu0 0.0
    %272 = vmatprep.subr.mxu0 0.0
    %273 = vmatpush1.msra.mxu0 0.0
    %274 = vmatprep.subr.mxu0 0.0
    %275 = vmatpush1.msra.mxu0 0.0
    %276 = vmatprep.subr.mxu0 0.0
    %277 = vmatpush1.msra.mxu0 0.0
    %278 = vmatprep.subr.mxu0 0.0
    %279 = vmatpush1.msra.mxu0 0.0
    %280 = vmatprep.subr.mxu0 0.0
    %281 = vmatpush1.msra.mxu0 0.0
    %282 = vmatprep.subr.mxu0 0.0
    %283 = vmatpush1.msra.mxu0 0.0
    %284 = vmatprep.subr.mxu0 0.0
    %285 = vmatpush1.msra.mxu0 0.0
    %286 = vmatprep.subr.mxu0 0.0
    %287 = vmatpush1.msra.mxu0 0.0
    %288 = vmatprep.subr.mxu0 0.0
    %289 = vmatpush1.msra.mxu0 0.0
    %290 = vmatprep.subr.mxu0 0.0
    %291 = vmatpush1.msra.mxu0 0.0
    %292 = vmatprep.subr.mxu0 0.0
    %293 = vmatpush1.msra.mxu0 0.0
    %294 = vmatprep.subr.mxu0 0.0
    %295 = vmatpush1.msra.mxu0 0.0
    %296 = vmatprep.subr.mxu0 0.0
    %297 = vmatpush1.msra.mxu0 0.0
    %298 = vmatprep.subr.mxu0 0.0
    %299 = vmatpush1.msra.mxu0 0.0
    %300 = vmatprep.subr.mxu0 0.0
    %301 = vmatpush1.msra.mxu0 0.0
    %302 = vmatprep.subr.mxu0 0.0
    %303 = vmatpush1.msra.mxu0 0.0
    %304 = vmatprep.subr.mxu0 0.0
    %305 = vmatpush1.msra.mxu0 0.0
    %306 = vmatprep.subr.mxu0 0.0
    %307 = vmatpush1.msra.mxu0 0.0
    %308 = vmatprep.subr.mxu0 0.0
    %309 = vmatpush1.msra.mxu0 0.0
    %310 = vmatprep.subr.mxu0 0.0
    %311 = vmatpush1.msra.mxu0 0.0
    %312 = vmatprep.subr.mxu0 0.0
    %313 = vmatpush1.msra.mxu0 0.0
    %314 = vmatprep.subr.mxu0 0.0
    %315 = vmatpush1.msra.mxu0 0.0
    %316 = vmatprep.mubr.f32.mxu0 0.0
    %317 = vmatmul.mubr.f32.gmra.mrb[0].mxu0 %v229
    %v318 = vpop.f32.mrb[0].mxu0
    %v319 = vadd.f32 %v190, %v318
    %v320 = vpop.f32.mrb[0].mxu0
    %321 = vmatprep.mubr.f32.mxu0 0.0
    %322 = vmatmul.mubr.f32.gmra.mrb[0].mxu0 %v232
    %v323 = vpop.f32.mrb[0].mxu0
    %v324 = vadd.f32 %v195, %v323
    %v325 = vpop.f32.mrb[0].mxu0
    %326 = vmatprep.mubr.f32.mxu0 0.0
    %327 = vmatmul.mubr.f32.gmra.mrb[0].mxu0 %v235
    %v328 = vpop.f32.mrb[0].mxu0
    %v329 = vadd.f32 %v200, %v328
    %v330 = vpop.f32.mrb[0].mxu0
    %331 = vmatprep.mubr.f32.mxu0 0.0
    %332 = vmatmul.mubr.f32.gmra.mrb[0].mxu0 %v238
    %v333 = vpop.f32.mrb[0].mxu0
    %v334 = vadd.f32 %v205, %v333
    %v335 = vpop.f32.mrb[0].mxu0
    %336 = vmatprep.mubr.f32.mxu0 0.0
    %337 = vmatmul.mubr.f32.gmra.mrb[0].mxu0 %v241
    %v338 = vpop.f32.mrb[0].mxu0
    %v339 = vadd.f32 %v210, %v338
    %v340 = vpop.f32.mrb[0].mxu0
    %341 = vmatprep.mubr.f32.mxu0 0.0
    %342 = vmatmul.mubr.f32.gmra.mrb[0].mxu0 %v244
    %v343 = vpop.f32.mrb[0].mxu0
    %v344 = vadd.f32 %v215, %v343
    %v345 = vpop.f32.mrb[0].mxu0
    %346 = vmatprep.mubr.f32.mxu0 0.0
    %347 = vmatmul.mubr.f32.gmra.mrb[0].mxu0 %v247
    %v348 = vpop.f32.mrb[0].mxu0
    %v349 = vadd.f32 %v220, %v348
    %v350 = vpop.f32.mrb[0].mxu0
    %351 = vmatprep.mubr.f32.mxu0 0.0
    %352 = vmatmul.mubr.f32.gmra.mrb[0].mxu0 %v250
    %v353 = vpop.f32.mrb[0].mxu0
    %v354 = vadd.f32 %v225, %v353
    %v355 = vpop.f32.mrb[0].mxu0
    %356 = vdwg.mxu0
    %v357 = vmax.f32 %v319, 0.0
    %v358 = vmax.f32 %v324, 0.0
    %v359 = vmax.f32 %v329, 0.0
    %v360 = vmax.f32 %v334, 0.0
    %v361 = vmax.f32 %v339, 0.0
    %v362 = vmax.f32 %v344, 0.0
    %v363 = vmax.f32 %v349, 0.0
    %v364 = vmax.f32 %v354, 0.0
    %v365 = vld [vmem:[%s5] sm:$0xff]
    %v366 = vld [vmem:[%s5 + $0x8] sm:$0xff]
    %v367 = vld [vmem:[%s6] sm:$0xff]
    %v368 = vld [vmem:[%s6 + $0x8] sm:$0xff]
    %370 = vset.pattern.permute.xlu0 0
    %371 = vperm.xlu0 %370, %v367
    %v372 = vpop.permute.xlu0 %371
    %375 = vset.pattern.permute.xlu0 0
    %376 = vperm.xlu0 %375, %v368
    %v377 = vpop.permute.xlu0 %376
    %vm379 = vcmask 523264
    %v381 = vsel %vm379, %v365, 0
    %v384 = vsel %vm379, %v366, 0
    %386 = vmatprep.subr.mxu0 0.0
    %387 = vmatpush1.msra.mxu0 %v357
    %388 = vmatprep.subr.mxu0 0.0
    %389 = vmatpush1.msra.mxu0 %v358
    %390 = vmatprep.subr.mxu0 0.0
    %391 = vmatpush1.msra.mxu0 %v359
    %392 = vmatprep.subr.mxu0 0.0
    %393 = vmatpush1.msra.mxu0 %v360
    %394 = vmatprep.subr.mxu0 0.0
    %395 = vmatpush1.msra.mxu0 %v361
    %396 = vmatprep.subr.mxu0 0.0
    %397 = vmatpush1.msra.mxu0 %v362
    %398 = vmatprep.subr.mxu0 0.0
    %399 = vmatpush1.msra.mxu0 %v363
    %400 = vmatprep.subr.mxu0 0.0
    %401 = vmatpush1.msra.mxu0 %v364
    %402 = vmatprep.subr.mxu0 0.0
    %403 = vmatpush1.msra.mxu0 0.0
    %404 = vmatprep.subr.mxu0 0.0
    %405 = vmatpush1.msra.mxu0 0.0
    %406 = vmatprep.subr.mxu0 0.0
    %407 = vmatpush1.msra.mxu0 0.0
    %408 = vmatprep.subr.mxu0 0.0
    %409 = vmatpush1.msra.mxu0 0.0
    %410 = vmatprep.subr.mxu0 0.0
    %411 = vmatpush1.msra.mxu0 0.0
    %412 = vmatprep.subr.mxu0 0.0
    %413 = vmatpush1.msra.mxu0 0.0
    %414 = vmatprep.subr.mxu0 0.0
    %415 = vmatpush1.msra.mxu0 0.0
    %416 = vmatprep.subr.mxu0 0.0
    %417 = vmatpush1.msra.mxu0 0.0
    %418 = vmatprep.subr.mxu0 0.0
    %419 = vmatpush1.msra.mxu0 0.0
    %420 = vmatprep.subr.mxu0 0.0
    %421 = vmatpush1.msra.mxu0 0.0
    %422 = vmatprep.subr.mxu0 0.0
    %423 = vmatpush1.msra.mxu0 0.0
    %424 = vmatprep.subr.mxu0 0.0
    %425 = vmatpush1.msra.mxu0 0.0
    %426 = vmatprep.subr.mxu0 0.0
    %427 = vmatpush1.msra.mxu0 0.0
    %428 = vmatprep.subr.mxu0 0.0
    %429 = vmatpush1.msra.mxu0 0.0
    %430 = vmatprep.subr.mxu0 0.0
    %431 = vmatpush1.msra.mxu0 0.0
    %432 = vmatprep.subr.mxu0 0.0
    %433 = vmatpush1.msra.mxu0 0.0
    %434 = vmatprep.subr.mxu0 0.0
    %435 = vmatpush1.msra.mxu0 0.0
    %436 = vmatprep.subr.mxu0 0.0
    %437 = vmatpush1.msra.mxu0 0.0
    %438 = vmatprep.subr.mxu0 0.0
    %439 = vmatpush1.msra.mxu0 0.0
    %440 = vmatprep.subr.mxu0 0.0
    %441 = vmatpush1.msra.mxu0 0.0
    %442 = vmatprep.subr.mxu0 0.0
    %443 = vmatpush1.msra.mxu0 0.0
    %444 = vmatprep.subr.mxu0 0.0
    %445 = vmatpush1.msra.mxu0 0.0
    %446 = vmatprep.subr.mxu0 0.0
    %447 = vmatpush1.msra.mxu0 0.0
    %448 = vmatprep.subr.mxu0 0.0
    %449 = vmatpush1.msra.mxu0 0.0
    %450 = vmatprep.mubr.f32.mxu0 0.0
    %451 = vmatmul.mubr.f32.gmra.mrb[0].mxu0 %v381
    %v452 = vpop.f32.mrb[0].mxu0
    %v453 = vadd.f32 %v372, %v452
    %v454 = vpop.f32.mrb[0].mxu0
    %455 = vmatprep.mubr.f32.mxu0 0.0
    %456 = vmatmul.mubr.f32.gmra.mrb[0].mxu0 %v384
    %v457 = vpop.f32.mrb[0].mxu0
    %v458 = vadd.f32 %v377, %v457
    %v459 = vpop.f32.mrb[0].mxu0
    %460 = vdwg.mxu0
    %v461 = vmax.f32 %v453, 0.0
    %v462 = vmax.f32 %v458, 0.0
    %v463 = vld [vmem:[%s7] sm:$0x1]
    %v464 = vld [vmem:[#allocation2] sm:$0x1]
    %466 = vset.pattern.permute.xlu0 0
    %467 = vperm.xlu0 %466, %v464
    %v468 = vpop.permute.xlu0 %467
    %v470 = vlaneseq
    %v471 = vshrl.u32 %v470, 7
    %v472 = vsub.s32 0, %v471
    %v473 = vrot.slane %v468, %v472
    %vm474 = vcmask 130048
    %v476 = vsel %vm474, %v463, 0
    %478 = vmatprep.subr.mxu0 0.0
    %479 = vmatpush1.msra.mxu0 %v461
    %480 = vmatprep.subr.mxu0 0.0
    %481 = vmatpush1.msra.mxu0 %v462
    %482 = vmatprep.subr.mxu0 0.0
    %483 = vmatpush1.msra.mxu0 0.0
    %484 = vmatprep.subr.mxu0 0.0
    %485 = vmatpush1.msra.mxu0 0.0
    %486 = vmatprep.subr.mxu0 0.0
    %487 = vmatpush1.msra.mxu0 0.0
    %488 = vmatprep.subr.mxu0 0.0
    %489 = vmatpush1.msra.mxu0 0.0
    %490 = vmatprep.subr.mxu0 0.0
    %491 = vmatpush1.msra.mxu0 0.0
    %492 = vmatprep.subr.mxu0 0.0
    %493 = vmatpush1.msra.mxu0 0.0
    %494 = vmatprep.subr.mxu0 0.0
    %495 = vmatpush1.msra.mxu0 0.0
    %496 = vmatprep.subr.mxu0 0.0
    %497 = vmatpush1.msra.mxu0 0.0
    %498 = vmatprep.subr.mxu0 0.0
    %499 = vmatpush1.msra.mxu0 0.0
    %500 = vmatprep.subr.mxu0 0.0
    %501 = vmatpush1.msra.mxu0 0.0
    %502 = vmatprep.subr.mxu0 0.0
    %503 = vmatpush1.msra.mxu0 0.0
    %504 = vmatprep.subr.mxu0 0.0
    %505 = vmatpush1.msra.mxu0 0.0
    %506 = vmatprep.subr.mxu0 0.0
    %507 = vmatpush1.msra.mxu0 0.0
    %508 = vmatprep.subr.mxu0 0.0
    %509 = vmatpush1.msra.mxu0 0.0
    %510 = vmatprep.subr.mxu0 0.0
    %511 = vmatpush1.msra.mxu0 0.0
    %512 = vmatprep.subr.mxu0 0.0
    %513 = vmatpush1.msra.mxu0 0.0
    %514 = vmatprep.subr.mxu0 0.0
    %515 = vmatpush1.msra.mxu0 0.0
    %516 = vmatprep.subr.mxu0 0.0
    %517 = vmatpush1.msra.mxu0 0.0
    %518 = vmatprep.subr.mxu0 0.0
    %519 = vmatpush1.msra.mxu0 0.0
    %520 = vmatprep.subr.mxu0 0.0
    %521 = vmatpush1.msra.mxu0 0.0
    %522 = vmatprep.subr.mxu0 0.0
    %523 = vmatpush1.msra.mxu0 0.0
    %524 = vmatprep.subr.mxu0 0.0
    %525 = vmatpush1.msra.mxu0 0.0
    %526 = vmatprep.subr.mxu0 0.0
    %527 = vmatpush1.msra.mxu0 0.0
    %528 = vmatprep.subr.mxu0 0.0
    %529 = vmatpush1.msra.mxu0 0.0
    %530 = vmatprep.subr.mxu0 0.0
    %531 = vmatpush1.msra.mxu0 0.0
    %532 = vmatprep.subr.mxu0 0.0
    %533 = vmatpush1.msra.mxu0 0.0
    %534 = vmatprep.subr.mxu0 0.0
    %535 = vmatpush1.msra.mxu0 0.0
    %536 = vmatprep.subr.mxu0 0.0
    %537 = vmatpush1.msra.mxu0 0.0
    %538 = vmatprep.subr.mxu0 0.0
    %539 = vmatpush1.msra.mxu0 0.0
    %540 = vmatprep.subr.mxu0 0.0
    %541 = vmatpush1.msra.mxu0 0.0
    %542 = vmatprep.mubr.f32.mxu0 0.0
    %543 = vmatmul.mubr.f32.gmra.mrb[0].mxu0 %v476
    %v544 = vpop.f32.mrb[0].mxu0
    %v545 = vadd.f32 %v473, %v544
    %v546 = vpop.f32.mrb[0].mxu0
    %547 = vdwg.mxu0
    %vm548 = vcmask 57344
    %549 = vst.msk [vmem:[#allocation3] sm:$0x1] %vm548, %v545
    // Predicated region
    $region38: #{tpu_custom_call.1} parent=1 // pred_check
      _
    $region39: #{tpu_custom_call.1} parent=1 // pred_check_branch
      %551 = sbr.rel (0) target = $region41
    $region40: #{tpu_custom_call.1} parent=1 // pred_region
      %s553 = ssub.s32 16, 16
      %554 = vsyncadd [#allocation4], %s553
      %s556 = sshll.u32 [#allocation3], 4
      %s557 = int_to_ptr.vmem [resolvable:$true] %s556
      %559 = dma.vmem_to_hbm [thread:$0]  %s557, 16, %s9, [#allocation4]
    $region41: #{tpu_custom_call.1} parent=1 // pred_fallthru
      _
    // Predicated region
    $region42: #{tpu_custom_call.1} parent=1 // pred_check
      _
    $region43: #{tpu_custom_call.1} parent=1 // pred_check_branch
      %561 = sbr.rel (0) target = $region45
    $region44: #{tpu_custom_call.1} parent=1 // pred_region
      %562 = dma.done [#allocation4], 16
    $region45: #{tpu_custom_call.1} parent=1 // pred_fallthru
      _
    %563 = vsyncpa [#allocation4], 1

</llo_original>
